<compile_context>
chip_gen: v5e
topology: v5e:2x2
jax: 0.10.0
libtpu: 0.0.40
codegen_flags: <defaults>
</compile_context>

<pallas_src>
import jax
import jax.numpy as jnp
from jax.experimental import pallas as pl
from jax.experimental.pallas import tpu as pltpu


def _round_up(x, m):
    return ((x + m - 1) // m) * m


def _event_head_kernel(x_ref, w_ref, b_ref, o_ref):
    # x_ref: [TM, H]  w_ref: [H, N]  b_ref: [1, N]  o_ref: [TM, N]
    acc = jnp.dot(x_ref[...], w_ref[...], preferred_element_type=jnp.float32)
    o_ref[...] = (acc + b_ref[...]).astype(o_ref.dtype)


def vl_bert_event_head(hidden_states, weight, bias, *, block_m=None):
    """VlBertEventHead forward: hidden_states @ weight.T + bias.

    hidden_states: (B, S, H); weight: (4, H) [nn.Linear layout]; bias: (4,).
    """
    B, S, H = hidden_states.shape
    N = weight.shape[0]  # 4
    dtype = hidden_states.dtype
    x_it = jnp.dtype(dtype).itemsize
    w_it = jnp.dtype(weight.dtype).itemsize
    M = B * S

    # Sublane-packing multiple: 8 rows for 32-bit dtypes, 16 for bf16 pairs.
    mult = 16 if x_it < 4 else 8

    # Fixed VMEM cost: weight + bias, double-buffered by the default pipeline.
    fixed_bytes = 2 * (H * N * w_it) + 2 * (N * 4)

    if block_m is None:
        # Double-buffered x tile + out tile + resident weight/bias under
        # ~24 MiB: fits every generation once vmem_limit_bytes is set
        # explicitly (v7x physical VMEM is 64 MiB / TC).
        budget_bytes = 24 * 1024 * 1024
        per_row_bytes = 2 * (H * x_it + N * x_it)
        tm = max(mult, (budget_bytes - fixed_bytes) // per_row_bytes)
        tm = min(4096, (tm // mult) * mult)
        # Keep at least 2 grid tiles (when M allows) so v7x's second
        # TensorCore gets work on the "parallel" axis; never over-tile tiny M.
        half_m = _round_up(pl.cdiv(M, 2), mult)
        block_m = max(mult, min(tm, half_m))

    grid_m = pl.cdiv(M, block_m)  # ragged last block handled by Pallas

    # Wrapper-side layout plumbing (tiny, no full-array copies of x):
    x2d = hidden_states.reshape(M, H)
    w_t = weight.T                                  # (H, N), native dtype
    b2d = bias.astype(jnp.float32).reshape(1, N)    # (1, N), f32 add

    tile_bytes = 2 * block_m * (H * x_it + N * x_it)
    vmem_limit = (fixed_bytes + tile_bytes) * 3 // 2 + (1 << 20)
    vmem_limit = int(min(max(vmem_limit, 16 << 20), 48 << 20))

    cost = pl.CostEstimate(
        flops=2 * M * H * N,
        transcendentals=0,
        bytes_accessed=M * H * x_it + M * N * x_it + H * N * w_it + N * 4,
    )

    out2d = pl.pallas_call(
        _event_head_kernel,
        out_shape=jax.ShapeDtypeStruct((M, N), dtype),
        grid_spec=pltpu.PrefetchScalarGridSpec(
            num_scalar_prefetch=0,
            grid=(grid_m,),
            in_specs=[
                pl.BlockSpec((block_m, H), lambda i: (i, 0)),  # streamed x tiles
                pl.BlockSpec((H, N), lambda i: (0, 0)),        # resident weight
                pl.BlockSpec((1, N), lambda i: (0, 0)),        # resident bias
            ],
            out_specs=pl.BlockSpec((block_m, N), lambda i: (i, 0)),
        ),
        compiler_params=pltpu.CompilerParams(
            # M tiles are independent -> shard across v7x's two TensorCores.
            dimension_semantics=("parallel",),
            vmem_limit_bytes=vmem_limit,
        ),
        cost_estimate=cost,
    )(x2d, w_t, b2d)

    return out2d.reshape(B, S, N)


if __name__ == "__main__":
    key = jax.random.PRNGKey(0)
    k_x, k_w, k_b, k_x2 = jax.random.split(key, 4)

    # Case 1: small shapes consistent with the module (batch=2, seq=8, hidden=32).
    B, S, H = 2, 8, 32
    hidden_states = jax.random.normal(k_x, (B, S, H), dtype=jnp.float32)
    weight = jax.random.normal(k_w, (4, H), dtype=jnp.float32) * 0.02
    bias = jax.random.normal(k_b, (4,), dtype=jnp.float32) * 0.02

    out = jax.block_until_ready(vl_bert_event_head(hidden_states, weight, bias))
    ref = hidden_states @ weight.T + bias
    assert out.shape == (B, S, 4)
    assert jnp.allclose(out, ref, atol=1e-5, rtol=1e-5)

    # Case 2: ragged M (B*S not a multiple of block_m) to exercise the
    # masked last-block path that replaced the wrapper-side padding.
    B2, S2 = 3, 5
    hs2 = jax.random.normal(k_x2, (B2, S2, H), dtype=jnp.float32)
    out2 = jax.block_until_ready(
        vl_bert_event_head(hs2, weight, bias, block_m=8))
    ref2 = hs2 @ weight.T + bias
    assert out2.shape == (B2, S2, 4)
    assert jnp.allclose(out2, ref2, atol=1e-5, rtol=1e-5)

    print("KERNEL_OK")
</pallas_src>

<mosaic_0001>
module attributes {stable_mosaic.version = 11 : i64} {
  func.func @_event_head_kernel(%arg0: i32, %arg1: memref<8x32xf32, #tpu.memory_space<vmem>>, %arg2: memref<32x4xf32, #tpu.memory_space<vmem>>, %arg3: memref<1x4xf32, #tpu.memory_space<vmem>>, %arg4: memref<8x4xf32, #tpu.memory_space<vmem>>) attributes {dimension_semantics = [#tpu.dimension_semantics<parallel>], iteration_bounds = array<i64: 2>, scalar_prefetch = 0 : i64, scratch_operands = 0 : i64, tpu.core_type = #tpu.core_type<tc>, window_params = [{transform_indices = @transform_0, window_bounds = array<i64: 8, 32>}, {pipeline_mode = #tpu.pipeline_mode<synchronous>, transform_indices = @transform_1, window_bounds = array<i64: 32, 4>}, {pipeline_mode = #tpu.pipeline_mode<synchronous>, transform_indices = @transform_2, window_bounds = array<i64: 1, 4>}, {transform_indices = @transform_3, window_bounds = array<i64: 8, 4>}]} {
    %c0 = arith.constant 0 : index
    %c0_0 = arith.constant 0 : index
    %0 = vector.load %arg1[%c0, %c0_0] : memref<8x32xf32, #tpu.memory_space<vmem>>, vector<8x32xf32>
    %c0_1 = arith.constant 0 : index
    %c0_2 = arith.constant 0 : index
    %1 = vector.load %arg2[%c0_1, %c0_2] : memref<32x4xf32, #tpu.memory_space<vmem>>, vector<32x4xf32>
    %cst = arith.constant dense<0.000000e+00> : vector<8x4xf32>
    %2 = tpu.matmul %0, %1, %cst {dimension_numbers = #tpu.dot_dimension_numbers<[1], [0], [0], [1], [0, 0, 1, 1], [], []>} : vector<8x32xf32>, vector<32x4xf32>, vector<8x4xf32> -> vector<8x4xf32>
    %c0_3 = arith.constant 0 : index
    %c0_4 = arith.constant 0 : index
    %3 = vector.load %arg3[%c0_3, %c0_4] : memref<1x4xf32, #tpu.memory_space<vmem>>, vector<1x4xf32>
    %4 = vector.broadcast %3 : vector<1x4xf32> to vector<8x4xf32>
    %5 = arith.addf %2, %4 : vector<8x4xf32>
    %c0_5 = arith.constant 0 : index
    %c0_6 = arith.constant 0 : index
    %6 = vector.load %arg4[%c0_5, %c0_6] : memref<8x4xf32, #tpu.memory_space<vmem>>, vector<8x4xf32>
    tpu.vector_store %arg4[%c0_5, %c0_6], %5 {strides = array<i32>} : memref<8x4xf32, #tpu.memory_space<vmem>>, vector<8x4xf32>,
    return
  }
  func.func @transform_0(%arg0: i32) -> (i32, i32) {
    %c0_i32 = arith.constant 0 : i32
    %c0_i32_0 = arith.constant 0 : i32
    return %arg0, %c0_i32 : i32, i32
  }
  func.func @transform_1(%arg0: i32) -> (i32, i32) {
    %c0_i32 = arith.constant 0 : i32
    %c0_i32_0 = arith.constant 0 : i32
    %c0_i32_1 = arith.constant 0 : i32
    return %c0_i32, %c0_i32_0 : i32, i32
  }
  func.func @transform_2(%arg0: i32) -> (i32, i32) {
    %c0_i32 = arith.constant 0 : i32
    %c0_i32_0 = arith.constant 0 : i32
    %c0_i32_1 = arith.constant 0 : i32
    return %c0_i32, %c0_i32_0 : i32, i32
  }
  func.func @transform_3(%arg0: i32) -> (i32, i32) {
    %c0_i32 = arith.constant 0 : i32
    %c0_i32_0 = arith.constant 0 : i32
    return %arg0, %c0_i32 : i32, i32
  }
}

</mosaic_0001>

<llo_original>
// kernel: tpu_custom_call.1
$region0: #{tpu_custom_call.1}
  #allocation0 [shape = 'u32[]', space=smem, size = 0x4, offset = 0x4, fixed_abs, tag = 'smem constant byte address 0x4 - core index']
  #allocation1 [shape = 'u32[72,128]{1,0:T(1,128)}', space=vmem, size = 0x9000, scoped, tag = 'internal scratch']
  %s0 = inlined_call_operand.vmem [shape: f32[16,32], index: 0, kind: input, shape index: {}]
  %s1 = inlined_call_operand.vmem [shape: f32[32,4], index: 1, kind: input, shape index: {}]
  %s2 = inlined_call_operand.vmem [shape: f32[1,4], index: 2, kind: input, shape index: {}]
  %s3 = inlined_call_operand.vmem [shape: f32[16,4], index: 3, kind: output, shape index: {}]
  %s4 = sld [smem:[#allocation0]]
  $region45: #{tpu_custom_call.1} parent=0
    _
  %s6 = ssub.s32 1, %s4
  %s7 = scalar_select 0, %s6, %s4
  loop: start=0, step=1, limit=4
  $region2: #{tpu_custom_call.1} parent=0 // loop_pre_header
    _
  $region3: #{tpu_custom_call.1} parent=0 // loop_header
    %s9 = sphi 0, %s13
    %p10 = scmp.ge.s32.totalorder %s9, 4
    %s19 = sphi 0, %s21
    %s22 = sphi 0, %s19
    %s23 = sphi 0, %s22
    %s39 = sphi 0, %s23
    %s43 = sphi 0, %s43
    %s45 = sphi 0, %s43
    %s46 = sphi 0, %s45
    %s60 = sphi 0, %s46
    %s64 = sphi 0, %s64
    %s66 = sphi 0, %s64
    %s67 = sphi 0, %s66
    %s81 = sphi 0, %s67
    %s87 = sphi 0, %s89
    %s90 = sphi 0, %s87
    %s91 = sphi 0, %s90
    %s107 = sphi 0, %s91
  $region4: #{tpu_custom_call.1} parent=0 // loop_header_branch
    %12 = sbr.rel (%p10) target = $region8
  $region5: #{tpu_custom_call.1} parent=0 // loop_body
    %s14 = ssub.s32 %s9, 1
    %s15 = ssub.s32 %s9, 2
    %s16 = sadd.s32 %s9, 1
    %s17 = ssub.s32 %s9, %s16
    %p18 = scmp.eq.s32.totalorder %s17, 0
    %s20 = sadd.s32 %s19, 1
    %s21 = scalar_select %p18, %s19, %s20
    %p24 = pneg %p18
    %p25 = scmp.eq.s32.totalorder %s9, 1
    %p26 = por %p24, %p25
    %p27 = scmp.ne.s32.totalorder %s19, %s22
    %p28 = scmp.eq.s32.totalorder %s9, 0
    %p29 = por %p27, %p28
    %p30 = scmp.ne.s32.totalorder %s19, %s22
    %p31 = scmp.eq.s32.totalorder %s14, 1
    %p32 = por %p30, %p31
    %p33 = scmp.ne.s32.totalorder %s22, %s23
    %p34 = scmp.eq.s32.totalorder %s14, 0
    %p35 = por %p33, %p34
    %p36 = scmp.ne.s32.totalorder %s22, %s23
    %p37 = scmp.eq.s32.totalorder %s15, 1
    %p38 = por %p36, %p37
    %p40 = scmp.ne.s32.totalorder %s23, %s39
    %p41 = scmp.eq.s32.totalorder %s15, 0
    %p42 = por %p40, %p41
    %s44 = sadd.s32 %s43, 1
    %p47 = scmp.eq.s32.totalorder %s9, 1
    %p48 = scmp.ne.s32.totalorder %s43, %s45
    %p49 = scmp.eq.s32.totalorder %s9, 0
    %p50 = por %p48, %p49
    %p51 = scmp.ne.s32.totalorder %s43, %s45
    %p52 = scmp.eq.s32.totalorder %s14, 1
    %p53 = por %p51, %p52
    %p54 = scmp.ne.s32.totalorder %s45, %s46
    %p55 = scmp.eq.s32.totalorder %s14, 0
    %p56 = por %p54, %p55
    %p57 = scmp.ne.s32.totalorder %s45, %s46
    %p58 = scmp.eq.s32.totalorder %s15, 1
    %p59 = por %p57, %p58
    %p61 = scmp.ne.s32.totalorder %s46, %s60
    %p62 = scmp.eq.s32.totalorder %s15, 0
    %p63 = por %p61, %p62
    %s65 = sadd.s32 %s64, 1
    %p68 = scmp.eq.s32.totalorder %s9, 1
    %p69 = scmp.ne.s32.totalorder %s64, %s66
    %p70 = scmp.eq.s32.totalorder %s9, 0
    %p71 = por %p69, %p70
    %p72 = scmp.ne.s32.totalorder %s64, %s66
    %p73 = scmp.eq.s32.totalorder %s14, 1
    %p74 = por %p72, %p73
    %p75 = scmp.ne.s32.totalorder %s66, %s67
    %p76 = scmp.eq.s32.totalorder %s14, 0
    %p77 = por %p75, %p76
    %p78 = scmp.ne.s32.totalorder %s66, %s67
    %p79 = scmp.eq.s32.totalorder %s15, 1
    %p80 = por %p78, %p79
    %p82 = scmp.ne.s32.totalorder %s67, %s81
    %p83 = scmp.eq.s32.totalorder %s15, 0
    %p84 = por %p82, %p83
    %s85 = ssub.s32 %s9, %s16
    %p86 = scmp.eq.s32.totalorder %s85, 0
    %s88 = sadd.s32 %s87, 1
    %s89 = scalar_select %p86, %s87, %s88
    %p92 = pneg %p86
    %p93 = scmp.eq.s32.totalorder %s9, 1
    %p94 = por %p92, %p93
    %p95 = scmp.ne.s32.totalorder %s87, %s90
    %p96 = scmp.eq.s32.totalorder %s9, 0
    %p97 = por %p95, %p96
    %p98 = scmp.ne.s32.totalorder %s87, %s90
    %p99 = scmp.eq.s32.totalorder %s14, 1
    %p100 = por %p98, %p99
    %p101 = scmp.ne.s32.totalorder %s90, %s91
    %p102 = scmp.eq.s32.totalorder %s14, 0
    %p103 = por %p101, %p102
    %p104 = scmp.ne.s32.totalorder %s90, %s91
    %p105 = scmp.eq.s32.totalorder %s15, 1
    %p106 = por %p104, %p105
    %p108 = scmp.ne.s32.totalorder %s91, %s107
    %p109 = scmp.eq.s32.totalorder %s15, 0
    %p110 = por %p108, %p109
    %p111 = scmp.le.s32.totalorder 1, %s9
    %p112 = scmp.lt.s32.totalorder %s9, 3
    %p113 = pnand %p111, %p112
    %p114 = pneg %p113
    // Predicated region
    $region9: #{tpu_custom_call.1} parent=5 // pred_check
      _
    $region10: #{tpu_custom_call.1} parent=5 // pred_check_branch
      %116 = sbr.rel (%p113) target = $region12
    $region11: #{tpu_custom_call.1} parent=5 // pred_region
      %s117 = ssub.s32 %s9, 1
      // Predicated region
      $region13: #{tpu_custom_call.1} parent=11 // pred_check
        %p118 = pneg %p56
      $region14: #{tpu_custom_call.1} parent=11 // pred_check_branch
        %120 = sbr.rel (%p118) target = $region16
      $region15: #{tpu_custom_call.1} parent=11 // pred_region
        _
      $region16: #{tpu_custom_call.1} parent=11 // pred_fallthru
        _
      // Predicated region
      $region17: #{tpu_custom_call.1} parent=11 // pred_check
        %p121 = pneg %p77
      $region18: #{tpu_custom_call.1} parent=11 // pred_check_branch
        %123 = sbr.rel (%p121) target = $region20
      $region19: #{tpu_custom_call.1} parent=11 // pred_region
        _
      $region20: #{tpu_custom_call.1} parent=11 // pred_fallthru
        _
    $region12: #{tpu_custom_call.1} parent=5 // pred_fallthru
      _
    %p124 = scmp.lt.s32.totalorder %s9, 2
    // Predicated region
    $region21: #{tpu_custom_call.1} parent=5 // pred_check
      %p125 = pneg %p124
    $region22: #{tpu_custom_call.1} parent=5 // pred_check_branch
      %127 = sbr.rel (%p125) target = $region24
    $region23: #{tpu_custom_call.1} parent=5 // pred_region
      // Predicated region
      $region25: #{tpu_custom_call.1} parent=23 // pred_check
        %p128 = pneg %p29
      $region26: #{tpu_custom_call.1} parent=23 // pred_check_branch
        %130 = sbr.rel (%p128) target = $region28
      $region27: #{tpu_custom_call.1} parent=23 // pred_region
        %p131 = scmp.lt.s32.totalorder %s9, 1
        %s132 = scalar_select %p131, %s9, 1
        %s133 = smul.addr %s132, 8
        %s134 = scalar_lea.vmem %s0, %s133
      $region28: #{tpu_custom_call.1} parent=23 // pred_fallthru
        _
    $region24: #{tpu_custom_call.1} parent=5 // pred_fallthru
      _
    %p135 = scmp.le.s32.totalorder 1, %s9
    %p136 = scmp.lt.s32.totalorder %s9, 3
    %p137 = pnand %p135, %p136
    %p138 = pneg %p137
    // Predicated region
    $region29: #{tpu_custom_call.1} parent=5 // pred_check
      _
    $region30: #{tpu_custom_call.1} parent=5 // pred_check_branch
      %140 = sbr.rel (%p137) target = $region32
    $region31: #{tpu_custom_call.1} parent=5 // pred_region
      %s141 = ssub.s32 %s9, 1
      %p142 = scmp.lt.s32.totalorder %s14, 1
      %s143 = scalar_select %p142, %s14, 1
      %s144 = smul.addr %s143, 8
      %s145 = scalar_lea.vmem %s0, %s144
      %p146 = pneg %p35
      %p147 = pneg %p32
      %p148 = pneg %p56
      %p149 = pneg %p53
      %p150 = pneg %p77
      %p151 = pneg %p74
      %p152 = pneg %p103
      %p153 = pneg %p100
      %p154 = scmp.lt.s32.totalorder %s14, 1
      %s155 = scalar_select %p154, %s14, 1
      %s156 = smul.addr %s155, 8
      %s157 = scalar_lea.vmem %s3, %s156
      %p158 = scmp.lt.s32.totalorder %s14, 1
      %s159 = scalar_select %p158, %s14, 1
      %s160 = smul.addr %s159, 8
      %s161 = scalar_lea.vmem %s0, %s160
      %p162 = scmp.lt.s32.totalorder %s14, 1
      %s163 = scalar_select %p162, %s14, 1
      %s164 = smul.addr %s163, 8
      %s165 = scalar_lea.vmem %s3, %s164
      %v166 = vld [vmem:[%s161] sm:$0xff]
      %v167 = vld [vmem:[%s1] sm:$0xff]
      %v168 = vld [vmem:[%s1 + $0x8] sm:$0xff]
      %v169 = vld [vmem:[%s1 + $0x10] sm:$0xff]
      %v170 = vld [vmem:[%s1 + $0x18] sm:$0xff]
      %v171 = vld [vmem:[%s2] sm:$0x1]
      %v173 = vperm.slane %v171, 0
      %vm175 = vcmask 261120
      %v177 = vsel %vm175, %v166, 0
      %179 = vmatpush.msra.mxu0 0.0
      %180 = vmatpush.msra.mxu0 0.0
      %181 = vmatpush.msra.mxu0 0.0
      %182 = vmatpush.msra.mxu0 0.0
      %183 = vmatpush.msra.mxu0 0.0
      %184 = vmatpush.msra.mxu0 0.0
      %185 = vmatpush.msra.mxu0 0.0
      %186 = vmatpush.msra.mxu0 0.0
      %187 = vmatpush.msra.mxu0 0.0
      %188 = vmatpush.msra.mxu0 0.0
      %189 = vmatpush.msra.mxu0 0.0
      %190 = vmatpush.msra.mxu0 0.0
      %191 = vmatpush.msra.mxu0 %v170
      %192 = vmatpush.msra.mxu0 %v169
      %193 = vmatpush.msra.mxu0 %v168
      %194 = vmatpush.msra.mxu0 %v167
      %195 = vmatmul.f32.gmra.mxu0 %v177
      %v196 = vpop.f32.mrf.mxu0
      %v197 = vadd.f32 %v173, %v196
      %198 = vdwg.mxu0
      %vm199 = vcmask 31744
      %200 = vst.msk [vmem:[%s165] sm:$0xff] %vm199, %v197
      %p201 = scmp.lt.s32.totalorder %s14, 1
      %s202 = scalar_select %p201, %s14, 1
      %s203 = smul.addr %s202, 8
      %s204 = scalar_lea.vmem %s3, %s203
      // Predicated region
      $region33: #{tpu_custom_call.1} parent=31 // pred_check
        %p205 = pneg %p100
      $region34: #{tpu_custom_call.1} parent=31 // pred_check_branch
        %207 = sbr.rel (%p205) target = $region36
      $region35: #{tpu_custom_call.1} parent=31 // pred_region
        _
      $region36: #{tpu_custom_call.1} parent=31 // pred_fallthru
        _
    $region32: #{tpu_custom_call.1} parent=5 // pred_fallthru
      _
    %p208 = scmp.le.s32.totalorder 2, %s9
    // Predicated region
    $region37: #{tpu_custom_call.1} parent=5 // pred_check
      %p209 = pneg %p208
    $region38: #{tpu_custom_call.1} parent=5 // pred_check_branch
      %211 = sbr.rel (%p209) target = $region40
    $region39: #{tpu_custom_call.1} parent=5 // pred_region
      %s212 = ssub.s32 %s9, 2
      // Predicated region
      $region41: #{tpu_custom_call.1} parent=39 // pred_check
        %p213 = pneg %p106
      $region42: #{tpu_custom_call.1} parent=39 // pred_check_branch
        %215 = sbr.rel (%p213) target = $region44
      $region43: #{tpu_custom_call.1} parent=39 // pred_region
        %p216 = scmp.lt.s32.totalorder %s15, 1
        %s217 = scalar_select %p216, %s15, 1
        %s218 = smul.addr %s217, 8
        %s219 = scalar_lea.vmem %s3, %s218
      $region44: #{tpu_custom_call.1} parent=39 // pred_fallthru
        _
    $region40: #{tpu_custom_call.1} parent=5 // pred_fallthru
      _
  $region6: #{tpu_custom_call.1} parent=0 // loop_footer
    %s13 = sadd.s32 1, %s9
  $region7: #{tpu_custom_call.1} parent=0 // loop_footer_branch
    %8 = sbr.rel target = $region3
  $region8: #{tpu_custom_call.1} parent=0 // loop_exit
    _

</llo_original>
